<compile_context>
chip_gen: v7x
topology: tpu7x:2x2x1
jax: 0.10.0
libtpu: 0.0.40
codegen_flags: <defaults>
</compile_context>

<pallas_src>
import jax
import jax.numpy as jnp
from jax.experimental import pallas as pl
from jax.experimental.pallas import tpu as pltpu


def _toeplitz_weights(conv_w, W):
    """Flatten a (Cout, Cin, 3, 3) conv weight into 3 banded block-Toeplitz
    GEMM matrices T[kh] of shape ((W+2)*Cin, W*Cout) such that

        out[h, w*Cout + co] = sum_kh  xp[h+kh, :] @ T[kh]

    where xp is the zero-padded image in (H+2, (W+2)*Cin) layout.
    T[kh, (w+kw)*Cin + c, w*Cout + co] = conv_w[co, c, kh, kw].
    """
    cout, cin = conv_w.shape[0], conv_w.shape[1]
    w_t = jnp.transpose(conv_w, (2, 3, 1, 0))          # (3, 3, Cin, Cout)
    blocks = []
    for kh in range(3):
        t_kh = jnp.zeros(((W + 2) * cin, W * cout), conv_w.dtype)
        for kw in range(3):
            shift = jnp.eye(W + 2, W, k=-kw, dtype=conv_w.dtype)  # rows w+kw
            t_kh = t_kh + jnp.kron(shift, w_t[kh, kw])
        blocks.append(t_kh)
    return jnp.stack(blocks)                            # (3, (W+2)Cin, W*Cout)


def _seg_conv_tanh_kernel(xp_ref, t_ref, b_ref, out_ref):
    """3x3 conv (as 3 Toeplitz GEMMs) + bias + tanh for one image.

    xp_ref : (1, H+2, (W+2)*Cin)    bf16  zero-padded NHWC image, (W,C) flat
    t_ref  : (3, (W+2)*Cin, W*Cout) bf16  banded block-Toeplitz conv weights
    b_ref  : (1, W*Cout)            f32   bias tiled along W
    out_ref: (1, H, W*Cout)         f32   lane-dense output slab
    """
    h = out_ref.shape[1]
    acc = jnp.dot(xp_ref[0, 0:h, :], t_ref[0],
                  preferred_element_type=jnp.float32)
    acc = acc + jnp.dot(xp_ref[0, 1:h + 1, :], t_ref[1],
                        preferred_element_type=jnp.float32)
    acc = acc + jnp.dot(xp_ref[0, 2:h + 2, :], t_ref[2],
                        preferred_element_type=jnp.float32)
    acc = acc + b_ref[...]                  # (1, W*Cout) broadcasts over rows
    out_ref[0] = jnp.tanh(acc).astype(out_ref.dtype)


@jax.jit
def colour_transfer_forward(x, conv_w, conv_b):
    """x: (N, C, H, W) f32. conv_w: (Cout, Cin, 3, 3). conv_b: (Cout,).

    Returns tanh(conv3x3(x) + b) in NCHW -- the value assigned to every key
    of `outs_dict` in the PyTorch module.
    """
    N, C, H, W = x.shape
    Cout = conv_w.shape[0]

    # ---- layout glue: NCHW -> padded NHWC with (W, C) flattened (~1x pass) ----
    x_nhwc = jnp.transpose(x, (0, 2, 3, 1))                      # (N, H, W, C)
    xp = jnp.pad(x_nhwc, ((0, 0), (1, 1), (1, 1), (0, 0)))
    xp = xp.reshape(N, H + 2, (W + 2) * C).astype(jnp.bfloat16)

    # ---- weight glue: Toeplitz GEMM weights (bf16) + W-tiled bias (f32) ----
    t = _toeplitz_weights(conv_w, W).astype(jnp.bfloat16)
    b_row = jnp.tile(conv_b, W).reshape(1, W * Cout).astype(jnp.float32)

    # TODO(synk): for large images add an H-block grid axis with a 1-row halo
    # (manual DMA) and W-block the Toeplitz weights; at these shapes one image
    # per grid step fits VMEM trivially.
    out_slab = pl.pallas_call(
        _seg_conv_tanh_kernel,
        out_shape=jax.ShapeDtypeStruct((N, H, W * Cout), jnp.float32),
        grid_spec=pltpu.PrefetchScalarGridSpec(
            num_scalar_prefetch=0,
            grid=(N,),
            in_specs=[
                pl.BlockSpec((1, H + 2, (W + 2) * C), lambda n: (n, 0, 0)),
                pl.BlockSpec((3, (W + 2) * C, W * Cout), lambda n: (0, 0, 0)),
                pl.BlockSpec((1, W * Cout), lambda n: (0, 0)),
            ],
            out_specs=pl.BlockSpec((1, H, W * Cout), lambda n: (n, 0, 0)),
        ),
        compiler_params=pltpu.CompilerParams(
            dimension_semantics=("parallel",)),
    )(xp, t, b_row)

    # ---- layout glue back to NCHW to match the PyTorch module convention ----
    # TODO(synk): accept/return NHWC to drop both transposes if downstream
    # consumers allow it; they are pure layout plumbing.
    return out_slab.reshape(N, H, W, Cout).transpose(0, 3, 1, 2)


def colour_transfer_model(x, conv_w, conv_b, outs_dict_keys):
    """Mirrors ColourTransferModel.forward: returns (out_imgs,) tuple."""
    tanh_out = colour_transfer_forward(x, conv_w, conv_b)
    out_imgs = {key: tanh_out for key in outs_dict_keys}
    return (out_imgs,)


if __name__ == "__main__":
    # Small shapes consistent with the module: NCHW input, conv seg-head.
    N, C, H, W = 2, 4, 16, 16
    Cout = 8                       # segmentation classes; W*Cout = 128 lanes
    outs_dict_keys = ("rgb", "lab")

    key = jax.random.PRNGKey(0)
    kx, kw, kb = jax.random.split(key, 3)
    x = jax.random.normal(kx, (N, C, H, W), dtype=jnp.float32)
    conv_w = 0.1 * jax.random.normal(kw, (Cout, C, 3, 3), dtype=jnp.float32)
    conv_b = 0.1 * jax.random.normal(kb, (Cout,), dtype=jnp.float32)

    (out_imgs,) = colour_transfer_model(x, conv_w, conv_b, outs_dict_keys)
    for v in out_imgs.values():
        jax.block_until_ready(v)

    # Reference: plain-JAX conv + tanh, both full-f32 and bf16-matched inputs.
    def ref_conv_tanh(xr, wr):
        r = jax.lax.conv_general_dilated(
            xr, wr, window_strides=(1, 1), padding="SAME",
            dimension_numbers=("NCHW", "OIHW", "NCHW"))
        return jnp.tanh(r + conv_b.reshape(1, Cout, 1, 1))

    ref_f32 = ref_conv_tanh(x, conv_w)
    ref_bf16 = ref_conv_tanh(x.astype(jnp.bfloat16).astype(jnp.float32),
                             conv_w.astype(jnp.bfloat16).astype(jnp.float32))
    for k in outs_dict_keys:
        assert out_imgs[k].shape == (N, Cout, H, W)
        assert jnp.allclose(out_imgs[k], ref_bf16, atol=1e-4), "mismatch vs bf16 ref"
        assert jnp.allclose(out_imgs[k], ref_f32, atol=2e-2), "mismatch vs f32 ref"

    print("KERNEL_OK")
</pallas_src>

<mosaic_0001>
module attributes {stable_mosaic.version = 11 : i64} {
  func.func @_seg_conv_tanh_kernel(%arg0: i32, %arg1: memref<1x18x72xbf16, #tpu.memory_space<vmem>>, %arg2: memref<3x72x128xbf16, #tpu.memory_space<vmem>>, %arg3: memref<1x128xf32, #tpu.memory_space<vmem>>, %arg4: memref<1x16x128xf32, #tpu.memory_space<vmem>>) attributes {dimension_semantics = [#tpu.dimension_semantics<parallel>], iteration_bounds = array<i64: 2>, scalar_prefetch = 0 : i64, scratch_operands = 0 : i64, tpu.core_type = #tpu.core_type<tc>, window_params = [{transform_indices = @transform_0, window_bounds = array<i64: 1, 18, 72>}, {pipeline_mode = #tpu.pipeline_mode<synchronous>, transform_indices = @transform_1, window_bounds = array<i64: 3, 72, 128>}, {pipeline_mode = #tpu.pipeline_mode<synchronous>, transform_indices = @transform_2, window_bounds = array<i64: 1, 128>}, {transform_indices = @transform_3, window_bounds = array<i64: 1, 16, 128>}]} {
    %c0 = arith.constant 0 : index
    %c0_0 = arith.constant 0 : index
    %c0_1 = arith.constant 0 : index
    %0 = vector.load %arg1[%c0, %c0_0, %c0_1] : memref<1x18x72xbf16, #tpu.memory_space<vmem>>, vector<1x16x72xbf16>
    %1 = vector.shape_cast %0 : vector<1x16x72xbf16> to vector<16x72xbf16>
    %c0_2 = arith.constant 0 : index
    %c0_3 = arith.constant 0 : index
    %c0_4 = arith.constant 0 : index
    %2 = vector.load %arg2[%c0_2, %c0_3, %c0_4] : memref<3x72x128xbf16, #tpu.memory_space<vmem>>, vector<1x72x128xbf16>
    %3 = vector.shape_cast %2 : vector<1x72x128xbf16> to vector<72x128xbf16>
    %cst = arith.constant dense<0.000000e+00> : vector<16x128xf32>
    %4 = tpu.matmul %1, %3, %cst {dimension_numbers = #tpu.dot_dimension_numbers<[1], [0], [0], [1], [0, 0, 1, 1], [], []>} : vector<16x72xbf16>, vector<72x128xbf16>, vector<16x128xf32> -> vector<16x128xf32>
    %c0_5 = arith.constant 0 : index
    %c1 = arith.constant 1 : index
    %c0_6 = arith.constant 0 : index
    %5 = vector.load %arg1[%c0_5, %c1, %c0_6] : memref<1x18x72xbf16, #tpu.memory_space<vmem>>, vector<1x16x72xbf16>
    %6 = vector.shape_cast %5 : vector<1x16x72xbf16> to vector<16x72xbf16>
    %c1_7 = arith.constant 1 : index
    %c0_8 = arith.constant 0 : index
    %c0_9 = arith.constant 0 : index
    %7 = vector.load %arg2[%c1_7, %c0_8, %c0_9] : memref<3x72x128xbf16, #tpu.memory_space<vmem>>, vector<1x72x128xbf16>
    %8 = vector.shape_cast %7 : vector<1x72x128xbf16> to vector<72x128xbf16>
    %cst_10 = arith.constant dense<0.000000e+00> : vector<16x128xf32>
    %9 = tpu.matmul %6, %8, %cst_10 {dimension_numbers = #tpu.dot_dimension_numbers<[1], [0], [0], [1], [0, 0, 1, 1], [], []>} : vector<16x72xbf16>, vector<72x128xbf16>, vector<16x128xf32> -> vector<16x128xf32>
    %10 = arith.addf %4, %9 : vector<16x128xf32>
    %c0_11 = arith.constant 0 : index
    %c2 = arith.constant 2 : index
    %c0_12 = arith.constant 0 : index
    %11 = vector.load %arg1[%c0_11, %c2, %c0_12] : memref<1x18x72xbf16, #tpu.memory_space<vmem>>, vector<1x16x72xbf16>
    %12 = vector.shape_cast %11 : vector<1x16x72xbf16> to vector<16x72xbf16>
    %c2_13 = arith.constant 2 : index
    %c0_14 = arith.constant 0 : index
    %c0_15 = arith.constant 0 : index
    %13 = vector.load %arg2[%c2_13, %c0_14, %c0_15] : memref<3x72x128xbf16, #tpu.memory_space<vmem>>, vector<1x72x128xbf16>
    %14 = vector.shape_cast %13 : vector<1x72x128xbf16> to vector<72x128xbf16>
    %cst_16 = arith.constant dense<0.000000e+00> : vector<16x128xf32>
    %15 = tpu.matmul %12, %14, %cst_16 {dimension_numbers = #tpu.dot_dimension_numbers<[1], [0], [0], [1], [0, 0, 1, 1], [], []>} : vector<16x72xbf16>, vector<72x128xbf16>, vector<16x128xf32> -> vector<16x128xf32>
    %16 = arith.addf %10, %15 : vector<16x128xf32>
    %c0_17 = arith.constant 0 : index
    %c0_18 = arith.constant 0 : index
    %17 = vector.load %arg3[%c0_17, %c0_18] : memref<1x128xf32, #tpu.memory_space<vmem>>, vector<1x128xf32>
    %18 = vector.broadcast %17 : vector<1x128xf32> to vector<16x128xf32>
    %19 = arith.addf %16, %18 : vector<16x128xf32>
    %20 = math.tanh %19 : vector<16x128xf32>
    %c0_19 = arith.constant 0 : index
    %c0_20 = arith.constant 0 : index
    %c0_21 = arith.constant 0 : index
    %21 = vector.load %arg4[%c0_19, %c0_20, %c0_21] : memref<1x16x128xf32, #tpu.memory_space<vmem>>, vector<1x16x128xf32>
    %22 = vector.shape_cast %21 : vector<1x16x128xf32> to vector<16x128xf32>
    %23 = vector.shape_cast %20 : vector<16x128xf32> to vector<1x16x128xf32>
    tpu.vector_store %arg4[%c0_19, %c0_20, %c0_21], %23 {strides = array<i32>} : memref<1x16x128xf32, #tpu.memory_space<vmem>>, vector<1x16x128xf32>,
    return
  }
  func.func @transform_0(%arg0: i32) -> (i32, i32, i32) {
    %c0_i32 = arith.constant 0 : i32
    %c0_i32_0 = arith.constant 0 : i32
    %c0_i32_1 = arith.constant 0 : i32
    return %arg0, %c0_i32, %c0_i32_0 : i32, i32, i32
  }
  func.func @transform_1(%arg0: i32) -> (i32, i32, i32) {
    %c0_i32 = arith.constant 0 : i32
    %c0_i32_0 = arith.constant 0 : i32
    %c0_i32_1 = arith.constant 0 : i32
    %c0_i32_2 = arith.constant 0 : i32
    return %c0_i32, %c0_i32_0, %c0_i32_1 : i32, i32, i32
  }
  func.func @transform_2(%arg0: i32) -> (i32, i32) {
    %c0_i32 = arith.constant 0 : i32
    %c0_i32_0 = arith.constant 0 : i32
    %c0_i32_1 = arith.constant 0 : i32
    return %c0_i32, %c0_i32_0 : i32, i32
  }
  func.func @transform_3(%arg0: i32) -> (i32, i32, i32) {
    %c0_i32 = arith.constant 0 : i32
    %c0_i32_0 = arith.constant 0 : i32
    %c0_i32_1 = arith.constant 0 : i32
    return %arg0, %c0_i32, %c0_i32_0 : i32, i32, i32
  }
}

</mosaic_0001>

<llo_original>
// kernel: tile.8
$region0: #{tile.8}
  #allocation0 [shape = 's32[1]{0}', space=sflag, size = 0x4, scoped, tag = 'scoped memory for tile.8']
  %s0 = inlined_call_operand.vmem [shape: f32[8], index: 0, kind: input, shape index: {}]
  %s1 = inlined_call_operand.vmem [shape: f32[16,8], index: 1, kind: output, shape index: {}]
  // Predicated region
  $region2: #{tile.8} parent=0 // pred_check
    _
  $region3: #{tile.8} parent=0 // pred_check_branch
    %3 = sbr.rel (0) target = $region5
  $region4: #{tile.8} parent=0 // pred_region
    _
  $region5: #{tile.8} parent=0 // pred_fallthru
    _
  %v4 = vld [vmem:[%s0] ss:$0 sm:$0xff]
  %5 = vst [vmem:[%s1] sm:$0xff] %v4
  %s6 = scalar_lea.vmem %s1, 8
  %7 = vst [vmem:[%s6] sm:$0xff] %v4

// kernel: tile.9
$region0: #{tile.9}
  %s0 = inlined_call_operand.vmem [shape: f32[16,8], index: 0, kind: input, shape index: {}]
  %s1 = inlined_call_operand.vmem [shape: f32[1,128], index: 1, kind: output, shape index: {}]
  $region1: #{tile.9} parent=0
    #allocation0 [shape = 'u8[4096]{0}', space=vmem, size = 0x1000, scoped, tag = 'scoped mem for output reshape']
    %v2 = vld [vmem:[%s0] sm:$0x1]
    %vm3 = vcmask 64512
    %4 = vst.msk [vmem:[#allocation0] sm:$0x1] %vm3, %v2
    %s5 = scalar_lea.vmem %s0, 15
    %v6 = vld [vmem:[%s5] sm:$0x1]
    %7 = vrot.lane.b32.xlu0 %v6, 120
    %v8 = vpop.permute.xlu0 %7
    %vm9 = vcmask 1048512
    %10 = vst.msk [vmem:[#allocation0] sm:$0x1] %vm9, %v8
    %s11 = scalar_lea.vmem %s0, 14
    %v12 = vld [vmem:[%s11] sm:$0x1]
    %13 = vrot.lane.b32.xlu0 %v12, 112
    %v14 = vpop.permute.xlu0 %13
    %vm15 = vcmask 982912
    %16 = vst.msk [vmem:[#allocation0] sm:$0x1] %vm15, %v14
    %s17 = scalar_lea.vmem %s0, 13
    %v18 = vld [vmem:[%s17] sm:$0x1]
    %19 = vrot.lane.b32.xlu0 %v18, 104
    %v20 = vpop.permute.xlu0 %19
    %vm21 = vcmask 917312
    %22 = vst.msk [vmem:[#allocation0] sm:$0x1] %vm21, %v20
    %s23 = scalar_lea.vmem %s0, 12
    %v24 = vld [vmem:[%s23] sm:$0x1]
    %25 = vrot.lane.b32.xlu0 %v24, 96
    %v26 = vpop.permute.xlu0 %25
    %vm27 = vcmask 851712
    %28 = vst.msk [vmem:[#allocation0] sm:$0x1] %vm27, %v26
    %s29 = scalar_lea.vmem %s0, 11
    %v30 = vld [vmem:[%s29] sm:$0x1]
    %31 = vrot.lane.b32.xlu0 %v30, 88
    %v32 = vpop.permute.xlu0 %31
    %vm33 = vcmask 786112
    %34 = vst.msk [vmem:[#allocation0] sm:$0x1] %vm33, %v32
    %s35 = scalar_lea.vmem %s0, 10
    %v36 = vld [vmem:[%s35] sm:$0x1]
    %37 = vrot.lane.b32.xlu0 %v36, 80
    %v38 = vpop.permute.xlu0 %37
    %vm39 = vcmask 720512
    %40 = vst.msk [vmem:[#allocation0] sm:$0x1] %vm39, %v38
    %s41 = scalar_lea.vmem %s0, 9
    %v42 = vld [vmem:[%s41] sm:$0x1]
    %43 = vrot.lane.b32.xlu0 %v42, 72
    %v44 = vpop.permute.xlu0 %43
    %vm45 = vcmask 654912
    %46 = vst.msk [vmem:[#allocation0] sm:$0x1] %vm45, %v44
    %s47 = scalar_lea.vmem %s0, 8
    %v48 = vld [vmem:[%s47] sm:$0x1]
    %49 = vrot.lane.b32.xlu0 %v48, 64
    %v50 = vpop.permute.xlu0 %49
    %vm51 = vcmask 589312
    %52 = vst.msk [vmem:[#allocation0] sm:$0x1] %vm51, %v50
    %s53 = scalar_lea.vmem %s0, 7
    %v54 = vld [vmem:[%s53] sm:$0x1]
    %55 = vrot.lane.b32.xlu0 %v54, 56
    %v56 = vpop.permute.xlu0 %55
    %vm57 = vcmask 523712
    %58 = vst.msk [vmem:[#allocation0] sm:$0x1] %vm57, %v56
    %s59 = scalar_lea.vmem %s0, 6
    %v60 = vld [vmem:[%s59] sm:$0x1]
    %61 = vrot.lane.b32.xlu0 %v60, 48
    %v62 = vpop.permute.xlu0 %61
    %vm63 = vcmask 458112
    %64 = vst.msk [vmem:[#allocation0] sm:$0x1] %vm63, %v62
    %s65 = scalar_lea.vmem %s0, 5
    %v66 = vld [vmem:[%s65] sm:$0x1]
    %67 = vrot.lane.b32.xlu0 %v66, 40
    %v68 = vpop.permute.xlu0 %67
    %vm69 = vcmask 392512
    %70 = vst.msk [vmem:[#allocation0] sm:$0x1] %vm69, %v68
    %s71 = scalar_lea.vmem %s0, 4
    %v72 = vld [vmem:[%s71] sm:$0x1]
    %73 = vrot.lane.b32.xlu0 %v72, 32
    %v74 = vpop.permute.xlu0 %73
    %vm75 = vcmask 326912
    %76 = vst.msk [vmem:[#allocation0] sm:$0x1] %vm75, %v74
    %s77 = scalar_lea.vmem %s0, 3
    %v78 = vld [vmem:[%s77] sm:$0x1]
    %79 = vrot.lane.b32.xlu0 %v78, 24
    %v80 = vpop.permute.xlu0 %79
    %vm81 = vcmask 261312
    %82 = vst.msk [vmem:[#allocation0] sm:$0x1] %vm81, %v80
    %s83 = scalar_lea.vmem %s0, 2
    %v84 = vld [vmem:[%s83] sm:$0x1]
    %85 = vrot.lane.b32.xlu0 %v84, 16
    %v86 = vpop.permute.xlu0 %85
    %vm87 = vcmask 195712
    %88 = vst.msk [vmem:[#allocation0] sm:$0x1] %vm87, %v86
    %s89 = scalar_lea.vmem %s0, 1
    %v90 = vld [vmem:[%s89] sm:$0x1]
    %91 = vrot.lane.b32.xlu0 %v90, 8
    %v92 = vpop.permute.xlu0 %91
    %vm93 = vcmask 130112
    %94 = vst.msk [vmem:[#allocation0] sm:$0x1] %vm93, %v92
    %s96 = sshllo.u32 0, 1
    %v98 = vld [vmem:[#allocation0] sm:%s96]
    %s99 = sshllo.u32 0, 1
    %100 = vst [vmem:[%s1] sm:%s99] %v98

// kernel: colour_transfer_forward.1
$region0: #{colour_transfer_forward.1}
  #allocation0 [shape = 'u32[]', space=smem, size = 0x4, offset = 0x4, fixed_abs, tag = 'smem constant byte address 0x4 - core index']
  #allocation1 [shape = 'u32[144,128]{1,0:T(1,128)}', space=vmem, size = 0x12000, scoped, tag = 'internal scratch']
  %s0 = inlined_call_operand.vmem [shape: bf16[2,18,72], index: 0, kind: input, shape index: {}]
  %s1 = inlined_call_operand.vmem [shape: bf16[3,72,128], index: 1, kind: input, shape index: {}]
  %s2 = inlined_call_operand.vmem [shape: f32[1,128], index: 2, kind: input, shape index: {}]
  %s3 = inlined_call_operand.vmem [shape: f32[2,16,128], index: 3, kind: output, shape index: {}]
  %s4 = sld [smem:[#allocation0]]
  $region45: #{colour_transfer_forward.1} parent=0
    _
  %s6 = ssub.s32 1, %s4
  %s7 = scalar_select 0, %s6, %s4
  loop: start=0, step=1, limit=4
  $region2: #{colour_transfer_forward.1} parent=0 // loop_pre_header
    _
  $region3: #{colour_transfer_forward.1} parent=0 // loop_header
    %s9 = sphi 0, %s13
    %p10 = scmp.ge.s32.totalorder %s9, 4
    %s19 = sphi 0, %s21
    %s22 = sphi 0, %s19
    %s23 = sphi 0, %s22
    %s39 = sphi 0, %s23
    %s43 = sphi 0, %s43
    %s45 = sphi 0, %s43
    %s46 = sphi 0, %s45
    %s60 = sphi 0, %s46
    %s64 = sphi 0, %s64
    %s66 = sphi 0, %s64
    %s67 = sphi 0, %s66
    %s81 = sphi 0, %s67
    %s87 = sphi 0, %s89
    %s90 = sphi 0, %s87
    %s91 = sphi 0, %s90
    %s107 = sphi 0, %s91
  $region4: #{colour_transfer_forward.1} parent=0 // loop_header_branch
    %12 = sbr.rel (%p10) target = $region8
  $region5: #{colour_transfer_forward.1} parent=0 // loop_body
    %s14 = ssub.s32 %s9, 1
    %s15 = ssub.s32 %s9, 2
    %s16 = sadd.s32 %s9, 1
    %s17 = ssub.s32 %s9, %s16
    %p18 = scmp.eq.s32.totalorder %s17, 0
    %s20 = sadd.s32 %s19, 1
    %s21 = scalar_select %p18, %s19, %s20
    %p24 = pneg %p18
    %p25 = scmp.eq.s32.totalorder %s9, 1
    %p26 = por %p24, %p25
    %p27 = scmp.ne.s32.totalorder %s19, %s22
    %p28 = scmp.eq.s32.totalorder %s9, 0
    %p29 = por %p27, %p28
    %p30 = scmp.ne.s32.totalorder %s19, %s22
    %p31 = scmp.eq.s32.totalorder %s14, 1
    %p32 = por %p30, %p31
    %p33 = scmp.ne.s32.totalorder %s22, %s23
    %p34 = scmp.eq.s32.totalorder %s14, 0
    %p35 = por %p33, %p34
    %p36 = scmp.ne.s32.totalorder %s22, %s23
    %p37 = scmp.eq.s32.totalorder %s15, 1
    %p38 = por %p36, %p37
    %p40 = scmp.ne.s32.totalorder %s23, %s39
    %p41 = scmp.eq.s32.totalorder %s15, 0
    %p42 = por %p40, %p41
    %s44 = sadd.s32 %s43, 1
    %p47 = scmp.eq.s32.totalorder %s9, 1
    %p48 = scmp.ne.s32.totalorder %s43, %s45
    %p49 = scmp.eq.s32.totalorder %s9, 0
    %p50 = por %p48, %p49
    %p51 = scmp.ne.s32.totalorder %s43, %s45
    %p52 = scmp.eq.s32.totalorder %s14, 1
    %p53 = por %p51, %p52
    %p54 = scmp.ne.s32.totalorder %s45, %s46
    %p55 = scmp.eq.s32.totalorder %s14, 0
    %p56 = por %p54, %p55
    %p57 = scmp.ne.s32.totalorder %s45, %s46
    %p58 = scmp.eq.s32.totalorder %s15, 1
    %p59 = por %p57, %p58
    %p61 = scmp.ne.s32.totalorder %s46, %s60
    %p62 = scmp.eq.s32.totalorder %s15, 0
    %p63 = por %p61, %p62
    %s65 = sadd.s32 %s64, 1
    %p68 = scmp.eq.s32.totalorder %s9, 1
    %p69 = scmp.ne.s32.totalorder %s64, %s66
    %p70 = scmp.eq.s32.totalorder %s9, 0
    %p71 = por %p69, %p70
    %p72 = scmp.ne.s32.totalorder %s64, %s66
    %p73 = scmp.eq.s32.totalorder %s14, 1
    %p74 = por %p72, %p73
    %p75 = scmp.ne.s32.totalorder %s66, %s67
    %p76 = scmp.eq.s32.totalorder %s14, 0
    %p77 = por %p75, %p76
    %p78 = scmp.ne.s32.totalorder %s66, %s67
    %p79 = scmp.eq.s32.totalorder %s15, 1
    %p80 = por %p78, %p79
    %p82 = scmp.ne.s32.totalorder %s67, %s81
    %p83 = scmp.eq.s32.totalorder %s15, 0
    %p84 = por %p82, %p83
    %s85 = ssub.s32 %s9, %s16
    %p86 = scmp.eq.s32.totalorder %s85, 0
    %s88 = sadd.s32 %s87, 1
    %s89 = scalar_select %p86, %s87, %s88
    %p92 = pneg %p86
    %p93 = scmp.eq.s32.totalorder %s9, 1
    %p94 = por %p92, %p93
    %p95 = scmp.ne.s32.totalorder %s87, %s90
    %p96 = scmp.eq.s32.totalorder %s9, 0
    %p97 = por %p95, %p96
    %p98 = scmp.ne.s32.totalorder %s87, %s90
    %p99 = scmp.eq.s32.totalorder %s14, 1
    %p100 = por %p98, %p99
    %p101 = scmp.ne.s32.totalorder %s90, %s91
    %p102 = scmp.eq.s32.totalorder %s14, 0
    %p103 = por %p101, %p102
    %p104 = scmp.ne.s32.totalorder %s90, %s91
    %p105 = scmp.eq.s32.totalorder %s15, 1
    %p106 = por %p104, %p105
    %p108 = scmp.ne.s32.totalorder %s91, %s107
    %p109 = scmp.eq.s32.totalorder %s15, 0
    %p110 = por %p108, %p109
    %p111 = scmp.le.s32.totalorder 1, %s9
    %p112 = scmp.lt.s32.totalorder %s9, 3
    %p113 = pnand %p111, %p112
    %p114 = pneg %p113
    // Predicated region
    $region9: #{colour_transfer_forward.1} parent=5 // pred_check
      _
    $region10: #{colour_transfer_forward.1} parent=5 // pred_check_branch
      %116 = sbr.rel (%p113) target = $region12
    $region11: #{colour_transfer_forward.1} parent=5 // pred_region
      %s117 = ssub.s32 %s9, 1
      // Predicated region
      $region13: #{colour_transfer_forward.1} parent=11 // pred_check
        %p118 = pneg %p56
      $region14: #{colour_transfer_forward.1} parent=11 // pred_check_branch
        %120 = sbr.rel (%p118) target = $region16
      $region15: #{colour_transfer_forward.1} parent=11 // pred_region
        _
      $region16: #{colour_transfer_forward.1} parent=11 // pred_fallthru
        _
      // Predicated region
      $region17: #{colour_transfer_forward.1} parent=11 // pred_check
        %p121 = pneg %p77
      $region18: #{colour_transfer_forward.1} parent=11 // pred_check_branch
        %123 = sbr.rel (%p121) target = $region20
      $region19: #{colour_transfer_forward.1} parent=11 // pred_region
        _
      $region20: #{colour_transfer_forward.1} parent=11 // pred_fallthru
        _
    $region12: #{colour_transfer_forward.1} parent=5 // pred_fallthru
      _
    %p124 = scmp.lt.s32.totalorder %s9, 2
    // Predicated region
    $region21: #{colour_transfer_forward.1} parent=5 // pred_check
      %p125 = pneg %p124
    $region22: #{colour_transfer_forward.1} parent=5 // pred_check_branch
      %127 = sbr.rel (%p125) target = $region24
    $region23: #{colour_transfer_forward.1} parent=5 // pred_region
      // Predicated region
      $region25: #{colour_transfer_forward.1} parent=23 // pred_check
        %p128 = pneg %p29
      $region26: #{colour_transfer_forward.1} parent=23 // pred_check_branch
        %130 = sbr.rel (%p128) target = $region28
      $region27: #{colour_transfer_forward.1} parent=23 // pred_region
        %p131 = scmp.lt.s32.totalorder %s9, 1
        %s132 = scalar_select %p131, %s9, 1
        %s133 = smul.addr %s132, 3
        %s134 = smul.addr %s133, 4
        %s135 = scalar_lea.vmem %s0, %s134
      $region28: #{colour_transfer_forward.1} parent=23 // pred_fallthru
        _
    $region24: #{colour_transfer_forward.1} parent=5 // pred_fallthru
      _
    %p136 = scmp.le.s32.totalorder 1, %s9
    %p137 = scmp.lt.s32.totalorder %s9, 3
    %p138 = pnand %p136, %p137
    %p139 = pneg %p138
    // Predicated region
    $region29: #{colour_transfer_forward.1} parent=5 // pred_check
      _
    $region30: #{colour_transfer_forward.1} parent=5 // pred_check_branch
      %141 = sbr.rel (%p138) target = $region32
    $region31: #{colour_transfer_forward.1} parent=5 // pred_region
      %s142 = ssub.s32 %s9, 1
      %p143 = scmp.lt.s32.totalorder %s14, 1
      %s144 = scalar_select %p143, %s14, 1
      %s145 = smul.addr %s144, 3
      %s146 = smul.addr %s145, 4
      %s147 = scalar_lea.vmem %s0, %s146
      %p148 = pneg %p35
      %p149 = pneg %p32
      %p150 = pneg %p56
      %p151 = pneg %p53
      %p152 = pneg %p77
      %p153 = pneg %p74
      %p154 = pneg %p103
      %p155 = pneg %p100
      %p156 = scmp.lt.s32.totalorder %s14, 1
      %s157 = scalar_select %p156, %s14, 1
      %s158 = smul.addr %s157, 2
      %s159 = smul.addr %s158, 8
      %s160 = scalar_lea.vmem %s3, %s159
      %p161 = scmp.lt.s32.totalorder %s14, 1
      %s162 = scalar_select %p161, %s14, 1
      %s163 = smul.addr %s162, 3
      %s164 = smul.addr %s163, 4
      %s165 = scalar_lea.vmem %s0, %s164
      %p166 = scmp.lt.s32.totalorder %s14, 1
      %s167 = scalar_select %p166, %s14, 1
      %s168 = smul.addr %s167, 2
      %s169 = smul.addr %s168, 8
      %s170 = scalar_lea.vmem %s3, %s169
      %v172 = vld [vmem:[%s165] sm:$0xf]
      %v173 = vld [vmem:[%s165 + $0x4] sm:$0xf]
      %v174 = vld [vmem:[%s1] sm:$0xf]
      %v175 = vld [vmem:[%s1 + $0x4] sm:$0xf]
      %v176 = vld [vmem:[%s1 + $0x8] sm:$0xf]
      %v177 = vld [vmem:[%s1 + $0xc] sm:$0xf]
      %v178 = vld [vmem:[%s1 + $0x10] sm:$0xf]
      %v179 = vld [vmem:[%s1 + $0x14] sm:$0xf]
      %v180 = vld [vmem:[%s1 + $0x18] sm:$0xf]
      %v181 = vld [vmem:[%s1 + $0x1c] sm:$0xf]
      %v182 = vld [vmem:[%s1 + $0x20] sm:$0xf]
      %v183 = vld [vmem:[%s165 + $0x8] sm:$0x1]
      %s184 = scalar_lea.vmem %s1, 36
      %v185 = vld [vmem:[%s184] sm:$0xf]
      %v186 = vld [vmem:[%s184 + $0x4] sm:$0xf]
      %v187 = vld [vmem:[%s184 + $0x8] sm:$0xf]
      %v188 = vld [vmem:[%s184 + $0xc] sm:$0xf]
      %v189 = vld [vmem:[%s184 + $0x10] sm:$0xf]
      %v190 = vld [vmem:[%s184 + $0x14] sm:$0xf]
      %v191 = vld [vmem:[%s184 + $0x18] sm:$0xf]
      %v192 = vld [vmem:[%s184 + $0x1c] sm:$0xf]
      %v193 = vld [vmem:[%s184 + $0x20] sm:$0xf]
      %v197 = vunpack.c.l.b16 %v172
      %v198 = vunpack.c.l.b16 %v173
      %v199 = vunpack.c.l.b16 %v183
      %v200 = vpack.c.b16 %v198, %v197
      %v201 = vpack.c.b16 %v199, %v199
      %vm202 = vsmask.f32 7424
      %v204 = vshrl.u32 %v200, 16
      %v206 = vshll.u32 %v200, 16
      %v208 = vrot.slane %v206, 1
      %v209 = vor.u32 %v204, %v208
      %v211 = vshll.u32 %v201, 16
      %v213 = vrot.slane %v211, 1
      %v214 = vsel %vm202, %v209, %v213
      %v224 = vunpack.c.l.b16 %v185
      %v225 = vunpack.c.l.b16 %v186
      %v226 = vunpack.c.l.b16 %v187
      %v227 = vunpack.c.l.b16 %v188
      %v228 = vunpack.c.l.b16 %v189
      %v229 = vunpack.c.l.b16 %v190
      %v230 = vunpack.c.l.b16 %v191
      %v231 = vunpack.c.l.b16 %v192
      %v232 = vunpack.c.l.b16 %v193
      %v233 = vpack.c.b16 %v225, %v224
      %v234 = vpack.c.b16 %v227, %v226
      %v235 = vpack.c.b16 %v229, %v228
      %v236 = vpack.c.b16 %v231, %v230
      %v237 = vpack.c.b16 %v232, %v232
      %vm242 = vcmask 588800
      %v244 = vsel %vm242, %v214, 0
      %vm246 = vcmask 1043456
      %v248 = vsel %vm246, %v237, 0
      %250 = vmatprep.subr.bf16.mxu0 0
      %251 = vmatpush1.bf16.msra.mxu0 %v233
      %252 = vmatprep.subr.bf16.mxu0 0
      %253 = vmatpush1.bf16.msra.mxu0 %v234
      %254 = vmatprep.subr.bf16.mxu0 0
      %255 = vmatpush1.bf16.msra.mxu0 %v235
      %256 = vmatprep.subr.bf16.mxu0 0
      %257 = vmatpush1.bf16.msra.mxu0 %v236
      %258 = vmatprep.subr.bf16.mxu0 0
      %259 = vmatpush1.bf16.msra.mxu0 %v248
      %260 = vmatprep.subr.bf16.mxu0 0
      %261 = vmatpush1.bf16.msra.mxu0 0
      %262 = vmatprep.subr.bf16.mxu0 0
      %263 = vmatpush1.bf16.msra.mxu0 0
      %264 = vmatprep.subr.bf16.mxu0 0
      %265 = vmatpush1.bf16.msra.mxu0 0
      %266 = vmatprep.subr.bf16.mxu0 0
      %267 = vmatpush1.bf16.msra.mxu0 0
      %268 = vmatprep.subr.bf16.mxu0 0
      %269 = vmatpush1.bf16.msra.mxu0 0
      %270 = vmatprep.subr.bf16.mxu0 0
      %271 = vmatpush1.bf16.msra.mxu0 0
      %272 = vmatprep.subr.bf16.mxu0 0
      %273 = vmatpush1.bf16.msra.mxu0 0
      %274 = vmatprep.subr.bf16.mxu0 0
      %275 = vmatpush1.bf16.msra.mxu0 0
      %276 = vmatprep.subr.bf16.mxu0 0
      %277 = vmatpush1.bf16.msra.mxu0 0
      %278 = vmatprep.subr.bf16.mxu0 0
      %279 = vmatpush1.bf16.msra.mxu0 0
      %280 = vmatprep.subr.bf16.mxu0 0
      %281 = vmatpush1.bf16.msra.mxu0 0
      %282 = vmatprep.mubr.bf16.mxu0 0
      %283 = vmatmul.mubr.bf16.gmra.mrb[0].mxu0 %v244
      %v284 = vpop.f32.mrb[0].mxu0
      %v285 = vadd.f32 0.0, %v284
      %v286 = vpop.f32.mrb[0].mxu0
      %v287 = vpop.f32.mrb[0].mxu0
      %v288 = vadd.f32 0.0, %v287
      %v289 = vpop.f32.mrb[0].mxu0
      %290 = vdwg.mxu0
      %v300 = vunpack.c.l.b16 %v174
      %v301 = vunpack.c.l.b16 %v175
      %v302 = vunpack.c.l.b16 %v176
      %v303 = vunpack.c.l.b16 %v177
      %v304 = vunpack.c.l.b16 %v178
      %v305 = vunpack.c.l.b16 %v179
      %v306 = vunpack.c.l.b16 %v180
      %v307 = vunpack.c.l.b16 %v181
      %v308 = vunpack.c.l.b16 %v182
      %v309 = vpack.c.b16 %v301, %v300
      %v310 = vpack.c.b16 %v303, %v302
      %v311 = vpack.c.b16 %v305, %v304
      %v312 = vpack.c.b16 %v307, %v306
      %v313 = vpack.c.b16 %v308, %v308
      %v318 = vsel %vm242, %v200, 0
      %v321 = vsel %vm246, %v313, 0
      %323 = vmatprep.subr.bf16.mxu0 0
      %324 = vmatpush1.bf16.msra.mxu0 %v309
      %325 = vmatprep.subr.bf16.mxu0 0
      %326 = vmatpush1.bf16.msra.mxu0 %v310
      %327 = vmatprep.subr.bf16.mxu0 0
      %328 = vmatpush1.bf16.msra.mxu0 %v311
      %329 = vmatprep.subr.bf16.mxu0 0
      %330 = vmatpush1.bf16.msra.mxu0 %v312
      %331 = vmatprep.subr.bf16.mxu0 0
      %332 = vmatpush1.bf16.msra.mxu0 %v321
      %333 = vmatprep.subr.bf16.mxu0 0
      %334 = vmatpush1.bf16.msra.mxu0 0
      %335 = vmatprep.subr.bf16.mxu0 0
      %336 = vmatpush1.bf16.msra.mxu0 0
      %337 = vmatprep.subr.bf16.mxu0 0
      %338 = vmatpush1.bf16.msra.mxu0 0
      %339 = vmatprep.subr.bf16.mxu0 0
      %340 = vmatpush1.bf16.msra.mxu0 0
      %341 = vmatprep.subr.bf16.mxu0 0
      %342 = vmatpush1.bf16.msra.mxu0 0
      %343 = vmatprep.subr.bf16.mxu0 0
      %344 = vmatpush1.bf16.msra.mxu0 0
      %345 = vmatprep.subr.bf16.mxu0 0
      %346 = vmatpush1.bf16.msra.mxu0 0
      %347 = vmatprep.subr.bf16.mxu0 0
      %348 = vmatpush1.bf16.msra.mxu0 0
      %349 = vmatprep.subr.bf16.mxu0 0
      %350 = vmatpush1.bf16.msra.mxu0 0
      %351 = vmatprep.subr.bf16.mxu0 0
      %352 = vmatpush1.bf16.msra.mxu0 0
      %353 = vmatprep.subr.bf16.mxu0 0
      %354 = vmatpush1.bf16.msra.mxu0 0
      %355 = vmatprep.mubr.bf16.mxu0 0
      %356 = vmatmul.mubr.bf16.gmra.mrb[0].mxu0 %v318
      %v357 = vpop.f32.mrb[0].mxu0
      %v358 = vadd.f32 %v285, %v357
      %v359 = vpop.f32.mrb[0].mxu0
      %v360 = vpop.f32.mrb[0].mxu0
      %v361 = vadd.f32 %v288, %v360
      %v362 = vpop.f32.mrb[0].mxu0
      %363 = vdwg.mxu0
      %v364 = vld [vmem:[%s165] sm:$0xe]
      %s365 = scalar_lea.vmem %s1, 72
      %v366 = vld [vmem:[%s365] sm:$0xf]
      %v367 = vld [vmem:[%s365 + $0x4] sm:$0xf]
      %v368 = vld [vmem:[%s365 + $0x8] sm:$0xf]
      %v369 = vld [vmem:[%s365 + $0xc] sm:$0xf]
      %v370 = vld [vmem:[%s365 + $0x10] sm:$0xf]
      %v371 = vld [vmem:[%s365 + $0x14] sm:$0xf]
      %v372 = vld [vmem:[%s365 + $0x18] sm:$0xf]
      %v373 = vld [vmem:[%s365 + $0x1c] sm:$0xf]
      %v374 = vld [vmem:[%s365 + $0x20] sm:$0xf]
      %v376 = vunpack.c.l.b16 %v364
      %v377 = vpack.c.b16 %v198, %v376
      %vm378 = vcmask 1046528
      %v379 = vrot.slane %v377, 1
      %v380 = vrot.slane %v201, 1
      %v381 = vsel %vm378, %v379, %v380
      %v391 = vunpack.c.l.b16 %v366
      %v392 = vunpack.c.l.b16 %v367
      %v393 = vunpack.c.l.b16 %v368
      %v394 = vunpack.c.l.b16 %v369
      %v395 = vunpack.c.l.b16 %v370
      %v396 = vunpack.c.l.b16 %v371
      %v397 = vunpack.c.l.b16 %v372
      %v398 = vunpack.c.l.b16 %v373
      %v399 = vunpack.c.l.b16 %v374
      %v400 = vpack.c.b16 %v392, %v391
      %v401 = vpack.c.b16 %v394, %v393
      %v402 = vpack.c.b16 %v396, %v395
      %v403 = vpack.c.b16 %v398, %v397
      %v404 = vpack.c.b16 %v399, %v399
      %v410 = vsel %vm242, %v381, 0
      %v413 = vsel %vm246, %v404, 0
      %415 = vmatprep.subr.bf16.mxu0 0
      %416 = vmatpush1.bf16.msra.mxu0 %v400
      %417 = vmatprep.subr.bf16.mxu0 0
      %418 = vmatpush1.bf16.msra.mxu0 %v401
      %419 = vmatprep.subr.bf16.mxu0 0
      %420 = vmatpush1.bf16.msra.mxu0 %v402
      %421 = vmatprep.subr.bf16.mxu0 0
      %422 = vmatpush1.bf16.msra.mxu0 %v403
      %423 = vmatprep.subr.bf16.mxu0 0
      %424 = vmatpush1.bf16.msra.mxu0 %v413
      %425 = vmatprep.subr.bf16.mxu0 0
      %426 = vmatpush1.bf16.msra.mxu0 0
      %427 = vmatprep.subr.bf16.mxu0 0
      %428 = vmatpush1.bf16.msra.mxu0 0
      %429 = vmatprep.subr.bf16.mxu0 0
      %430 = vmatpush1.bf16.msra.mxu0 0
      %431 = vmatprep.subr.bf16.mxu0 0
      %432 = vmatpush1.bf16.msra.mxu0 0
      %433 = vmatprep.subr.bf16.mxu0 0
      %434 = vmatpush1.bf16.msra.mxu0 0
      %435 = vmatprep.subr.bf16.mxu0 0
      %436 = vmatpush1.bf16.msra.mxu0 0
      %437 = vmatprep.subr.bf16.mxu0 0
      %438 = vmatpush1.bf16.msra.mxu0 0
      %439 = vmatprep.subr.bf16.mxu0 0
      %440 = vmatpush1.bf16.msra.mxu0 0
      %441 = vmatprep.subr.bf16.mxu0 0
      %442 = vmatpush1.bf16.msra.mxu0 0
      %443 = vmatprep.subr.bf16.mxu0 0
      %444 = vmatpush1.bf16.msra.mxu0 0
      %445 = vmatprep.subr.bf16.mxu0 0
      %446 = vmatpush1.bf16.msra.mxu0 0
      %447 = vmatprep.mubr.bf16.mxu0 0
      %448 = vmatmul.mubr.bf16.gmra.mrb[0].mxu0 %v410
      %v449 = vpop.f32.mrb[0].mxu0
      %v450 = vadd.f32 0.0, %v449
      %v451 = vpop.f32.mrb[0].mxu0
      %v452 = vpop.f32.mrb[0].mxu0
      %v453 = vadd.f32 0.0, %v452
      %v454 = vpop.f32.mrb[0].mxu0
      %455 = vdwg.mxu0
      %v456 = vadd.f32 %v358, %v450
      %v457 = vadd.f32 %v361, %v453
      %v458 = vld [vmem:[%s2] sm:$0x1]
      %v460 = vlaneseq
      %v461 = vshrl.u32 %v460, 7
      %v462 = vsub.s32 0, %v461
      %v463 = vrot.slane %v458, %v462
      %v465 = vadd.f32 %v456, %v463
      %v466 = vadd.f32 %v457, %v463
      %v467 = vtanh.pop %v465
      %v468 = vtanh.pop %v466
      %469 = vst [vmem:[%s170] sm:$0xff] %v467
      %470 = vst [vmem:[%s170 + $0x8] sm:$0xff] %v468
      %p471 = scmp.lt.s32.totalorder %s14, 1
      %s472 = scalar_select %p471, %s14, 1
      %s473 = smul.addr %s472, 2
      %s474 = smul.addr %s473, 8
      %s475 = scalar_lea.vmem %s3, %s474
      // Predicated region
      $region33: #{colour_transfer_forward.1} parent=31 // pred_check
        %p476 = pneg %p100
      $region34: #{colour_transfer_forward.1} parent=31 // pred_check_branch
        %478 = sbr.rel (%p476) target = $region36
      $region35: #{colour_transfer_forward.1} parent=31 // pred_region
        _
      $region36: #{colour_transfer_forward.1} parent=31 // pred_fallthru
        _
    $region32: #{colour_transfer_forward.1} parent=5 // pred_fallthru
      _
    %p479 = scmp.le.s32.totalorder 2, %s9
    // Predicated region
    $region37: #{colour_transfer_forward.1} parent=5 // pred_check
      %p480 = pneg %p479
    $region38: #{colour_transfer_forward.1} parent=5 // pred_check_branch
      %482 = sbr.rel (%p480) target = $region40
    $region39: #{colour_transfer_forward.1} parent=5 // pred_region
      %s483 = ssub.s32 %s9, 2
      // Predicated region
      $region41: #{colour_transfer_forward.1} parent=39 // pred_check
        %p484 = pneg %p106
      $region42: #{colour_transfer_forward.1} parent=39 // pred_check_branch
        %486 = sbr.rel (%p484) target = $region44
      $region43: #{colour_transfer_forward.1} parent=39 // pred_region
        %p487 = scmp.lt.s32.totalorder %s15, 1
        %s488 = scalar_select %p487, %s15, 1
        %s489 = smul.addr %s488, 2
        %s490 = smul.addr %s489, 8
        %s491 = scalar_lea.vmem %s3, %s490
      $region44: #{colour_transfer_forward.1} parent=39 // pred_fallthru
        _
    $region40: #{colour_transfer_forward.1} parent=5 // pred_fallthru
      _
  $region6: #{colour_transfer_forward.1} parent=0 // loop_footer
    %s13 = sadd.s32 1, %s9
  $region7: #{colour_transfer_forward.1} parent=0 // loop_footer_branch
    %8 = sbr.rel target = $region3
  $region8: #{colour_transfer_forward.1} parent=0 // loop_exit
    _

</llo_original>
